<compile_context>
chip_gen: v5e
topology: v5e:2x2
jax: 0.10.0
libtpu: 0.0.40
codegen_flags: <defaults>
</compile_context>

<pallas_src>
import jax
import jax.numpy as jnp
from jax import lax
from jax.experimental import pallas as pl
from jax.experimental.pallas import tpu as pltpu


def lstm_last_kernel(x_ref, wx_ref, wh_ref, b_ref, wl_ref, bl_ref, out_ref):
    # x_ref  : (T, In) f32     wx_ref : (In, 4H) f32 (In==1) / bf16
    # wh_ref : (H, 4H) bf16    b_ref  : (1, 4H)  f32
    # wl_ref : (1, H)  f32 (Out==1) / (H, Out) bf16
    # bl_ref : (1, Out) f32    out_ref: (1, Out) f32
    T, In = x_ref.shape
    H = wh_ref.shape[0]
    Out = bl_ref.shape[1]

    # ---- input projection for ALL timesteps, hoisted out of the recurrence ----
    if In == 1:
        # degenerate K=1 matmul -> VPU broadcast multiply, stays exact f32
        x_proj = x_ref[...] * wx_ref[...] + b_ref[...]          # (T, 4H)
    else:
        x_proj = (jnp.dot(x_ref[...].astype(wx_ref.dtype), wx_ref[...],
                          preferred_element_type=jnp.float32)
                  + b_ref[...])

    wh = wh_ref[...]                                            # (H, 4H) bf16, loaded once

    # ---- hoisted lane constants (gate blocks [i | f | g | o] on the lane axis) ----
    lane = lax.broadcasted_iota(jnp.int32, (1, 4 * H), 1)
    is_g = jnp.logical_and(lane >= 2 * H, lane < 3 * H)         # tanh lanes
    # sigmoid(x) = 0.5*tanh(0.5*x) + 0.5  -> pre-scale i/f/o lanes by 0.5
    scale = jnp.where(is_g, jnp.float32(1.0), jnp.float32(0.5))  # (1, 4H)

    # zero initial hidden/cell state, carried in vregs across the unrolled loop
    h = jnp.zeros((1, H), jnp.float32)
    c = jnp.zeros((1, H), jnp.float32)

    # T is a small static trip count -> full unroll, static slice indices
    for t in range(T):
        # single fused recurrence matmul, bf16 operands, f32 accumulation
        rec = jnp.dot(h.astype(jnp.bfloat16), wh,
                      preferred_element_type=jnp.float32)        # (1, 4H)
        gates = x_proj[t:t + 1, :] + rec

        # ONE transcendental pass over the gate vector (EUP), then VPU fixup
        th = jnp.tanh(gates * scale)                             # (1, 4H)
        act = jnp.where(is_g, th, 0.5 * th + 0.5)                # sigmoid on i/f/o lanes

        i = act[:, 0 * H:1 * H]
        f = act[:, 1 * H:2 * H]
        g = act[:, 2 * H:3 * H]
        o = act[:, 3 * H:4 * H]

        c = f * c + i * g
        h = o * jnp.tanh(c)                                      # 2nd (and last) EUP op

    # ---- linear head on the final hidden state == predictions[-1] ----
    if Out == 1:
        # degenerate N=1 matmul -> VPU multiply + lane reduce, no MXU round trip
        out_ref[...] = (jnp.sum(h * wl_ref[...], axis=-1, keepdims=True)
                        + bl_ref[...])
    else:
        out_ref[...] = (jnp.dot(h.astype(wl_ref.dtype), wl_ref[...],
                                preferred_element_type=jnp.float32)
                        + bl_ref[...])


def init_params(key, input_size, hidden_size, output_size):
    """Deterministic init with PyTorch-style shapes and uniform(-k, k)."""
    k_lstm = 1.0 / jnp.sqrt(hidden_size)
    k_lin = 1.0 / jnp.sqrt(hidden_size)
    keys = jax.random.split(key, 6)
    w_ih = jax.random.uniform(keys[0], (4 * hidden_size, input_size),
                              jnp.float32, -k_lstm, k_lstm)
    w_hh = jax.random.uniform(keys[1], (4 * hidden_size, hidden_size),
                              jnp.float32, -k_lstm, k_lstm)
    b_ih = jax.random.uniform(keys[2], (4 * hidden_size,),
                              jnp.float32, -k_lstm, k_lstm)
    b_hh = jax.random.uniform(keys[3], (4 * hidden_size,),
                              jnp.float32, -k_lstm, k_lstm)
    w_lin = jax.random.uniform(keys[4], (output_size, hidden_size),
                               jnp.float32, -k_lin, k_lin)
    b_lin = jax.random.uniform(keys[5], (output_size,),
                               jnp.float32, -k_lin, k_lin)
    return w_ih, w_hh, b_ih, b_hh, w_lin, b_lin


def pack_params(params, hidden_size, input_size, output_size):
    """One-time parameter prep into kernel-ready packed arrays.

    PyTorch layout: w_ih (4H, In), w_hh (4H, H) with gate rows [i; f; g; o].
    Packed layout : gate COLUMN blocks [i | f | g | o] along the 4H lane axis.
    Matmul operands (wh, and wx/wl when they actually hit the MXU) are bf16.
    """
    w_ih, w_hh, b_ih, b_hh, w_lin, b_lin = params
    if input_size == 1:
        wx_cat = jnp.asarray(w_ih, jnp.float32).T                # (1, 4H), VPU path
    else:
        wx_cat = jnp.asarray(w_ih, jnp.float32).T.astype(jnp.bfloat16)
    wh_cat = jnp.asarray(w_hh, jnp.float32).T.astype(jnp.bfloat16)  # (H, 4H) bf16
    b_cat = (b_ih + b_hh).reshape(1, 4 * hidden_size).astype(jnp.float32)
    if output_size == 1:
        wl = jnp.asarray(w_lin, jnp.float32).reshape(1, hidden_size)  # (1, H), VPU path
    else:
        wl = jnp.asarray(w_lin, jnp.float32).T.astype(jnp.bfloat16)   # (H, Out)
    bl = jnp.asarray(b_lin, jnp.float32).reshape(1, output_size)
    return wx_cat, wh_cat, b_cat, wl, bl


def lstm_model_forward(input_seq, packed_params, hidden_size, input_size,
                       output_size):
    wx_cat, wh_cat, b_cat, wl, bl = packed_params
    T = input_seq.shape[0]
    # input_seq.view(len(input_seq), 1, -1) with the batch=1 axis squeezed
    x = input_seq.reshape(T, input_size).astype(jnp.float32)

    vmem = pl.BlockSpec(memory_space=pltpu.MemorySpace.VMEM)
    out = pl.pallas_call(
        lstm_last_kernel,
        out_shape=jax.ShapeDtypeStruct((1, output_size), jnp.float32),
        in_specs=[vmem] * 6,
        out_specs=vmem,
    )(x, wx_cat, wh_cat, b_cat, wl, bl)
    return out[0]   # shape (output_size,) == predictions[-1]


def reference_forward(input_seq, params, hidden_size, input_size, output_size):
    """Pure-JAX f32 reference replicating the PyTorch forward."""
    w_ih, w_hh, b_ih, b_hh, w_lin, b_lin = params
    T = input_seq.shape[0]
    x = input_seq.reshape(T, input_size).astype(jnp.float32)
    H = hidden_size
    h = jnp.zeros((H,), jnp.float32)
    c = jnp.zeros((H,), jnp.float32)

    def step(carry, x_t):
        h, c = carry
        gates = w_ih @ x_t + b_ih + w_hh @ h + b_hh
        i = jax.nn.sigmoid(gates[0 * H:1 * H])
        f = jax.nn.sigmoid(gates[1 * H:2 * H])
        g = jnp.tanh(gates[2 * H:3 * H])
        o = jax.nn.sigmoid(gates[3 * H:4 * H])
        c_new = f * c + i * g
        h_new = o * jnp.tanh(c_new)
        return (h_new, c_new), h_new

    (h_T, _), _ = lax.scan(step, (h, c), x)
    return w_lin @ h_T + b_lin


if __name__ == "__main__":
    input_size = 1
    hidden_size = 32     # 4H = 128 -> packed gates fill exactly one lane width
    output_size = 1
    seq_len = 8

    key = jax.random.PRNGKey(0)
    k_in, k_par = jax.random.split(key)
    input_seq = jax.random.normal(k_in, (seq_len,), jnp.float32)
    params = init_params(k_par, input_size, hidden_size, output_size)
    packed = pack_params(params, hidden_size, input_size, output_size)

    out = lstm_model_forward(input_seq, packed, hidden_size, input_size,
                             output_size)
    out = jax.block_until_ready(out)

    ref = reference_forward(input_seq, params, hidden_size, input_size,
                            output_size)
    assert out.shape == (output_size,)
    # bf16 recurrence matmul vs f32 reference -> relaxed tolerance (~1e-2)
    assert jnp.allclose(out, ref, atol=2e-2, rtol=2e-2), (out, ref)

    print("KERNEL_OK")
</pallas_src>

<mosaic_0001>
module attributes {stable_mosaic.version = 11 : i64} {
  func.func @lstm_last_kernel(%arg0: memref<8x1xf32, #tpu.memory_space<vmem>>, %arg1: memref<1x128xf32, #tpu.memory_space<vmem>>, %arg2: memref<32x128xbf16, #tpu.memory_space<vmem>>, %arg3: memref<1x128xf32, #tpu.memory_space<vmem>>, %arg4: memref<1x32xf32, #tpu.memory_space<vmem>>, %arg5: memref<1x1xf32, #tpu.memory_space<vmem>>, %arg6: memref<1x1xf32, #tpu.memory_space<vmem>>) attributes {dimension_semantics = [], scalar_prefetch = 0 : i64, scratch_operands = 0 : i64, tpu.core_type = #tpu.core_type<tc>} {
    %c0 = arith.constant 0 : index
    %c0_0 = arith.constant 0 : index
    %0 = vector.load %arg0[%c0, %c0_0] : memref<8x1xf32, #tpu.memory_space<vmem>>, vector<8x1xf32>
    %c0_1 = arith.constant 0 : index
    %c0_2 = arith.constant 0 : index
    %1 = vector.load %arg1[%c0_1, %c0_2] : memref<1x128xf32, #tpu.memory_space<vmem>>, vector<1x128xf32>
    %2 = vector.broadcast %0 : vector<8x1xf32> to vector<8x128xf32>
    %3 = vector.broadcast %1 : vector<1x128xf32> to vector<8x128xf32>
    %4 = arith.mulf %2, %3 : vector<8x128xf32>
    %c0_3 = arith.constant 0 : index
    %c0_4 = arith.constant 0 : index
    %5 = vector.load %arg3[%c0_3, %c0_4] : memref<1x128xf32, #tpu.memory_space<vmem>>, vector<1x128xf32>
    %6 = vector.broadcast %5 : vector<1x128xf32> to vector<8x128xf32>
    %7 = arith.addf %4, %6 : vector<8x128xf32>
    %c0_5 = arith.constant 0 : index
    %c0_6 = arith.constant 0 : index
    %8 = vector.load %arg2[%c0_5, %c0_6] : memref<32x128xbf16, #tpu.memory_space<vmem>>, vector<32x128xbf16>
    %9 = tpu.iota {dimensions = array<i32: 1>} : vector<1x128xi32>
    %c64_i32 = arith.constant 64 : i32
    %10 = vector.broadcast %c64_i32 : i32 to vector<1x128xi32>
    %11 = arith.cmpi sge, %9, %10 : vector<1x128xi32>
    %c96_i32 = arith.constant 96 : i32
    %12 = vector.broadcast %c96_i32 : i32 to vector<1x128xi32>
    %13 = arith.cmpi slt, %9, %12 : vector<1x128xi32>
    %14 = arith.andi %11, %13 : vector<1x128xi1>
    %cst = arith.constant 1.000000e+00 : f32
    %cst_7 = arith.constant 5.000000e-01 : f32
    %15 = vector.broadcast %cst : f32 to vector<1x128xf32>
    %16 = vector.broadcast %cst_7 : f32 to vector<1x128xf32>
    %17 = arith.select %14, %15, %16 : vector<1x128xi1>, vector<1x128xf32>
    %cst_8 = arith.constant 0.000000e+00 : f32
    %18 = vector.broadcast %cst_8 : f32 to vector<1x32xf32>
    %cst_9 = arith.constant 0.000000e+00 : f32
    %19 = vector.broadcast %cst_9 : f32 to vector<1x32xf32>
    %20 = arith.truncf %18 : vector<1x32xf32> to vector<1x32xbf16>
    %cst_10 = arith.constant dense<0.000000e+00> : vector<1x128xf32>
    %21 = tpu.matmul %20, %8, %cst_10 {dimension_numbers = #tpu.dot_dimension_numbers<[1], [0], [0], [1], [0, 0, 1, 1], [], []>} : vector<1x32xbf16>, vector<32x128xbf16>, vector<1x128xf32> -> vector<1x128xf32>
    %22 = vector.extract_strided_slice %7 {offsets = [0, 0], sizes = [1, 128], strides = [1, 1]} : vector<8x128xf32> to vector<1x128xf32>
    %23 = arith.addf %22, %21 : vector<1x128xf32>
    %24 = arith.mulf %23, %17 : vector<1x128xf32>
    %25 = math.tanh %24 : vector<1x128xf32>
    %cst_11 = arith.constant 5.000000e-01 : f32
    %26 = vector.broadcast %cst_11 : f32 to vector<1x128xf32>
    %27 = arith.mulf %26, %25 : vector<1x128xf32>
    %cst_12 = arith.constant 5.000000e-01 : f32
    %28 = vector.broadcast %cst_12 : f32 to vector<1x128xf32>
    %29 = arith.addf %27, %28 : vector<1x128xf32>
    %30 = arith.select %14, %25, %29 : vector<1x128xi1>, vector<1x128xf32>
    %31 = vector.extract_strided_slice %30 {offsets = [0, 0], sizes = [1, 32], strides = [1, 1]} : vector<1x128xf32> to vector<1x32xf32>
    %32 = vector.extract_strided_slice %30 {offsets = [0, 32], sizes = [1, 32], strides = [1, 1]} : vector<1x128xf32> to vector<1x32xf32>
    %33 = vector.extract_strided_slice %30 {offsets = [0, 64], sizes = [1, 32], strides = [1, 1]} : vector<1x128xf32> to vector<1x32xf32>
    %34 = vector.extract_strided_slice %30 {offsets = [0, 96], sizes = [1, 32], strides = [1, 1]} : vector<1x128xf32> to vector<1x32xf32>
    %35 = arith.mulf %32, %19 : vector<1x32xf32>
    %36 = arith.mulf %31, %33 : vector<1x32xf32>
    %37 = arith.addf %35, %36 : vector<1x32xf32>
    %38 = math.tanh %37 : vector<1x32xf32>
    %39 = arith.mulf %34, %38 : vector<1x32xf32>
    %40 = arith.truncf %39 : vector<1x32xf32> to vector<1x32xbf16>
    %cst_13 = arith.constant dense<0.000000e+00> : vector<1x128xf32>
    %41 = tpu.matmul %40, %8, %cst_13 {dimension_numbers = #tpu.dot_dimension_numbers<[1], [0], [0], [1], [0, 0, 1, 1], [], []>} : vector<1x32xbf16>, vector<32x128xbf16>, vector<1x128xf32> -> vector<1x128xf32>
    %42 = vector.extract_strided_slice %7 {offsets = [1, 0], sizes = [1, 128], strides = [1, 1]} : vector<8x128xf32> to vector<1x128xf32>
    %43 = arith.addf %42, %41 : vector<1x128xf32>
    %44 = arith.mulf %43, %17 : vector<1x128xf32>
    %45 = math.tanh %44 : vector<1x128xf32>
    %cst_14 = arith.constant 5.000000e-01 : f32
    %46 = vector.broadcast %cst_14 : f32 to vector<1x128xf32>
    %47 = arith.mulf %46, %45 : vector<1x128xf32>
    %cst_15 = arith.constant 5.000000e-01 : f32
    %48 = vector.broadcast %cst_15 : f32 to vector<1x128xf32>
    %49 = arith.addf %47, %48 : vector<1x128xf32>
    %50 = arith.select %14, %45, %49 : vector<1x128xi1>, vector<1x128xf32>
    %51 = vector.extract_strided_slice %50 {offsets = [0, 0], sizes = [1, 32], strides = [1, 1]} : vector<1x128xf32> to vector<1x32xf32>
    %52 = vector.extract_strided_slice %50 {offsets = [0, 32], sizes = [1, 32], strides = [1, 1]} : vector<1x128xf32> to vector<1x32xf32>
    %53 = vector.extract_strided_slice %50 {offsets = [0, 64], sizes = [1, 32], strides = [1, 1]} : vector<1x128xf32> to vector<1x32xf32>
    %54 = vector.extract_strided_slice %50 {offsets = [0, 96], sizes = [1, 32], strides = [1, 1]} : vector<1x128xf32> to vector<1x32xf32>
    %55 = arith.mulf %52, %37 : vector<1x32xf32>
    %56 = arith.mulf %51, %53 : vector<1x32xf32>
    %57 = arith.addf %55, %56 : vector<1x32xf32>
    %58 = math.tanh %57 : vector<1x32xf32>
    %59 = arith.mulf %54, %58 : vector<1x32xf32>
    %60 = arith.truncf %59 : vector<1x32xf32> to vector<1x32xbf16>
    %cst_16 = arith.constant dense<0.000000e+00> : vector<1x128xf32>
    %61 = tpu.matmul %60, %8, %cst_16 {dimension_numbers = #tpu.dot_dimension_numbers<[1], [0], [0], [1], [0, 0, 1, 1], [], []>} : vector<1x32xbf16>, vector<32x128xbf16>, vector<1x128xf32> -> vector<1x128xf32>
    %62 = vector.extract_strided_slice %7 {offsets = [2, 0], sizes = [1, 128], strides = [1, 1]} : vector<8x128xf32> to vector<1x128xf32>
    %63 = arith.addf %62, %61 : vector<1x128xf32>
    %64 = arith.mulf %63, %17 : vector<1x128xf32>
    %65 = math.tanh %64 : vector<1x128xf32>
    %cst_17 = arith.constant 5.000000e-01 : f32
    %66 = vector.broadcast %cst_17 : f32 to vector<1x128xf32>
    %67 = arith.mulf %66, %65 : vector<1x128xf32>
    %cst_18 = arith.constant 5.000000e-01 : f32
    %68 = vector.broadcast %cst_18 : f32 to vector<1x128xf32>
    %69 = arith.addf %67, %68 : vector<1x128xf32>
    %70 = arith.select %14, %65, %69 : vector<1x128xi1>, vector<1x128xf32>
    %71 = vector.extract_strided_slice %70 {offsets = [0, 0], sizes = [1, 32], strides = [1, 1]} : vector<1x128xf32> to vector<1x32xf32>
    %72 = vector.extract_strided_slice %70 {offsets = [0, 32], sizes = [1, 32], strides = [1, 1]} : vector<1x128xf32> to vector<1x32xf32>
    %73 = vector.extract_strided_slice %70 {offsets = [0, 64], sizes = [1, 32], strides = [1, 1]} : vector<1x128xf32> to vector<1x32xf32>
    %74 = vector.extract_strided_slice %70 {offsets = [0, 96], sizes = [1, 32], strides = [1, 1]} : vector<1x128xf32> to vector<1x32xf32>
    %75 = arith.mulf %72, %57 : vector<1x32xf32>
    %76 = arith.mulf %71, %73 : vector<1x32xf32>
    %77 = arith.addf %75, %76 : vector<1x32xf32>
    %78 = math.tanh %77 : vector<1x32xf32>
    %79 = arith.mulf %74, %78 : vector<1x32xf32>
    %80 = arith.truncf %79 : vector<1x32xf32> to vector<1x32xbf16>
    %cst_19 = arith.constant dense<0.000000e+00> : vector<1x128xf32>
    %81 = tpu.matmul %80, %8, %cst_19 {dimension_numbers = #tpu.dot_dimension_numbers<[1], [0], [0], [1], [0, 0, 1, 1], [], []>} : vector<1x32xbf16>, vector<32x128xbf16>, vector<1x128xf32> -> vector<1x128xf32>
    %82 = vector.extract_strided_slice %7 {offsets = [3, 0], sizes = [1, 128], strides = [1, 1]} : vector<8x128xf32> to vector<1x128xf32>
    %83 = arith.addf %82, %81 : vector<1x128xf32>
    %84 = arith.mulf %83, %17 : vector<1x128xf32>
    %85 = math.tanh %84 : vector<1x128xf32>
    %cst_20 = arith.constant 5.000000e-01 : f32
    %86 = vector.broadcast %cst_20 : f32 to vector<1x128xf32>
    %87 = arith.mulf %86, %85 : vector<1x128xf32>
    %cst_21 = arith.constant 5.000000e-01 : f32
    %88 = vector.broadcast %cst_21 : f32 to vector<1x128xf32>
    %89 = arith.addf %87, %88 : vector<1x128xf32>
    %90 = arith.select %14, %85, %89 : vector<1x128xi1>, vector<1x128xf32>
    %91 = vector.extract_strided_slice %90 {offsets = [0, 0], sizes = [1, 32], strides = [1, 1]} : vector<1x128xf32> to vector<1x32xf32>
    %92 = vector.extract_strided_slice %90 {offsets = [0, 32], sizes = [1, 32], strides = [1, 1]} : vector<1x128xf32> to vector<1x32xf32>
    %93 = vector.extract_strided_slice %90 {offsets = [0, 64], sizes = [1, 32], strides = [1, 1]} : vector<1x128xf32> to vector<1x32xf32>
    %94 = vector.extract_strided_slice %90 {offsets = [0, 96], sizes = [1, 32], strides = [1, 1]} : vector<1x128xf32> to vector<1x32xf32>
    %95 = arith.mulf %92, %77 : vector<1x32xf32>
    %96 = arith.mulf %91, %93 : vector<1x32xf32>
    %97 = arith.addf %95, %96 : vector<1x32xf32>
    %98 = math.tanh %97 : vector<1x32xf32>
    %99 = arith.mulf %94, %98 : vector<1x32xf32>
    %100 = arith.truncf %99 : vector<1x32xf32> to vector<1x32xbf16>
    %cst_22 = arith.constant dense<0.000000e+00> : vector<1x128xf32>
    %101 = tpu.matmul %100, %8, %cst_22 {dimension_numbers = #tpu.dot_dimension_numbers<[1], [0], [0], [1], [0, 0, 1, 1], [], []>} : vector<1x32xbf16>, vector<32x128xbf16>, vector<1x128xf32> -> vector<1x128xf32>
    %102 = vector.extract_strided_slice %7 {offsets = [4, 0], sizes = [1, 128], strides = [1, 1]} : vector<8x128xf32> to vector<1x128xf32>
    %103 = arith.addf %102, %101 : vector<1x128xf32>
    %104 = arith.mulf %103, %17 : vector<1x128xf32>
    %105 = math.tanh %104 : vector<1x128xf32>
    %cst_23 = arith.constant 5.000000e-01 : f32
    %106 = vector.broadcast %cst_23 : f32 to vector<1x128xf32>
    %107 = arith.mulf %106, %105 : vector<1x128xf32>
    %cst_24 = arith.constant 5.000000e-01 : f32
    %108 = vector.broadcast %cst_24 : f32 to vector<1x128xf32>
    %109 = arith.addf %107, %108 : vector<1x128xf32>
    %110 = arith.select %14, %105, %109 : vector<1x128xi1>, vector<1x128xf32>
    %111 = vector.extract_strided_slice %110 {offsets = [0, 0], sizes = [1, 32], strides = [1, 1]} : vector<1x128xf32> to vector<1x32xf32>
    %112 = vector.extract_strided_slice %110 {offsets = [0, 32], sizes = [1, 32], strides = [1, 1]} : vector<1x128xf32> to vector<1x32xf32>
    %113 = vector.extract_strided_slice %110 {offsets = [0, 64], sizes = [1, 32], strides = [1, 1]} : vector<1x128xf32> to vector<1x32xf32>
    %114 = vector.extract_strided_slice %110 {offsets = [0, 96], sizes = [1, 32], strides = [1, 1]} : vector<1x128xf32> to vector<1x32xf32>
    %115 = arith.mulf %112, %97 : vector<1x32xf32>
    %116 = arith.mulf %111, %113 : vector<1x32xf32>
    %117 = arith.addf %115, %116 : vector<1x32xf32>
    %118 = math.tanh %117 : vector<1x32xf32>
    %119 = arith.mulf %114, %118 : vector<1x32xf32>
    %120 = arith.truncf %119 : vector<1x32xf32> to vector<1x32xbf16>
    %cst_25 = arith.constant dense<0.000000e+00> : vector<1x128xf32>
    %121 = tpu.matmul %120, %8, %cst_25 {dimension_numbers = #tpu.dot_dimension_numbers<[1], [0], [0], [1], [0, 0, 1, 1], [], []>} : vector<1x32xbf16>, vector<32x128xbf16>, vector<1x128xf32> -> vector<1x128xf32>
    %122 = vector.extract_strided_slice %7 {offsets = [5, 0], sizes = [1, 128], strides = [1, 1]} : vector<8x128xf32> to vector<1x128xf32>
    %123 = arith.addf %122, %121 : vector<1x128xf32>
    %124 = arith.mulf %123, %17 : vector<1x128xf32>
    %125 = math.tanh %124 : vector<1x128xf32>
    %cst_26 = arith.constant 5.000000e-01 : f32
    %126 = vector.broadcast %cst_26 : f32 to vector<1x128xf32>
    %127 = arith.mulf %126, %125 : vector<1x128xf32>
    %cst_27 = arith.constant 5.000000e-01 : f32
    %128 = vector.broadcast %cst_27 : f32 to vector<1x128xf32>
    %129 = arith.addf %127, %128 : vector<1x128xf32>
    %130 = arith.select %14, %125, %129 : vector<1x128xi1>, vector<1x128xf32>
    %131 = vector.extract_strided_slice %130 {offsets = [0, 0], sizes = [1, 32], strides = [1, 1]} : vector<1x128xf32> to vector<1x32xf32>
    %132 = vector.extract_strided_slice %130 {offsets = [0, 32], sizes = [1, 32], strides = [1, 1]} : vector<1x128xf32> to vector<1x32xf32>
    %133 = vector.extract_strided_slice %130 {offsets = [0, 64], sizes = [1, 32], strides = [1, 1]} : vector<1x128xf32> to vector<1x32xf32>
    %134 = vector.extract_strided_slice %130 {offsets = [0, 96], sizes = [1, 32], strides = [1, 1]} : vector<1x128xf32> to vector<1x32xf32>
    %135 = arith.mulf %132, %117 : vector<1x32xf32>
    %136 = arith.mulf %131, %133 : vector<1x32xf32>
    %137 = arith.addf %135, %136 : vector<1x32xf32>
    %138 = math.tanh %137 : vector<1x32xf32>
    %139 = arith.mulf %134, %138 : vector<1x32xf32>
    %140 = arith.truncf %139 : vector<1x32xf32> to vector<1x32xbf16>
    %cst_28 = arith.constant dense<0.000000e+00> : vector<1x128xf32>
    %141 = tpu.matmul %140, %8, %cst_28 {dimension_numbers = #tpu.dot_dimension_numbers<[1], [0], [0], [1], [0, 0, 1, 1], [], []>} : vector<1x32xbf16>, vector<32x128xbf16>, vector<1x128xf32> -> vector<1x128xf32>
    %142 = vector.extract_strided_slice %7 {offsets = [6, 0], sizes = [1, 128], strides = [1, 1]} : vector<8x128xf32> to vector<1x128xf32>
    %143 = arith.addf %142, %141 : vector<1x128xf32>
    %144 = arith.mulf %143, %17 : vector<1x128xf32>
    %145 = math.tanh %144 : vector<1x128xf32>
    %cst_29 = arith.constant 5.000000e-01 : f32
    %146 = vector.broadcast %cst_29 : f32 to vector<1x128xf32>
    %147 = arith.mulf %146, %145 : vector<1x128xf32>
    %cst_30 = arith.constant 5.000000e-01 : f32
    %148 = vector.broadcast %cst_30 : f32 to vector<1x128xf32>
    %149 = arith.addf %147, %148 : vector<1x128xf32>
    %150 = arith.select %14, %145, %149 : vector<1x128xi1>, vector<1x128xf32>
    %151 = vector.extract_strided_slice %150 {offsets = [0, 0], sizes = [1, 32], strides = [1, 1]} : vector<1x128xf32> to vector<1x32xf32>
    %152 = vector.extract_strided_slice %150 {offsets = [0, 32], sizes = [1, 32], strides = [1, 1]} : vector<1x128xf32> to vector<1x32xf32>
    %153 = vector.extract_strided_slice %150 {offsets = [0, 64], sizes = [1, 32], strides = [1, 1]} : vector<1x128xf32> to vector<1x32xf32>
    %154 = vector.extract_strided_slice %150 {offsets = [0, 96], sizes = [1, 32], strides = [1, 1]} : vector<1x128xf32> to vector<1x32xf32>
    %155 = arith.mulf %152, %137 : vector<1x32xf32>
    %156 = arith.mulf %151, %153 : vector<1x32xf32>
    %157 = arith.addf %155, %156 : vector<1x32xf32>
    %158 = math.tanh %157 : vector<1x32xf32>
    %159 = arith.mulf %154, %158 : vector<1x32xf32>
    %160 = arith.truncf %159 : vector<1x32xf32> to vector<1x32xbf16>
    %cst_31 = arith.constant dense<0.000000e+00> : vector<1x128xf32>
    %161 = tpu.matmul %160, %8, %cst_31 {dimension_numbers = #tpu.dot_dimension_numbers<[1], [0], [0], [1], [0, 0, 1, 1], [], []>} : vector<1x32xbf16>, vector<32x128xbf16>, vector<1x128xf32> -> vector<1x128xf32>
    %162 = vector.extract_strided_slice %7 {offsets = [7, 0], sizes = [1, 128], strides = [1, 1]} : vector<8x128xf32> to vector<1x128xf32>
    %163 = arith.addf %162, %161 : vector<1x128xf32>
    %164 = arith.mulf %163, %17 : vector<1x128xf32>
    %165 = math.tanh %164 : vector<1x128xf32>
    %cst_32 = arith.constant 5.000000e-01 : f32
    %166 = vector.broadcast %cst_32 : f32 to vector<1x128xf32>
    %167 = arith.mulf %166, %165 : vector<1x128xf32>
    %cst_33 = arith.constant 5.000000e-01 : f32
    %168 = vector.broadcast %cst_33 : f32 to vector<1x128xf32>
    %169 = arith.addf %167, %168 : vector<1x128xf32>
    %170 = arith.select %14, %165, %169 : vector<1x128xi1>, vector<1x128xf32>
    %171 = vector.extract_strided_slice %170 {offsets = [0, 0], sizes = [1, 32], strides = [1, 1]} : vector<1x128xf32> to vector<1x32xf32>
    %172 = vector.extract_strided_slice %170 {offsets = [0, 32], sizes = [1, 32], strides = [1, 1]} : vector<1x128xf32> to vector<1x32xf32>
    %173 = vector.extract_strided_slice %170 {offsets = [0, 64], sizes = [1, 32], strides = [1, 1]} : vector<1x128xf32> to vector<1x32xf32>
    %174 = vector.extract_strided_slice %170 {offsets = [0, 96], sizes = [1, 32], strides = [1, 1]} : vector<1x128xf32> to vector<1x32xf32>
    %175 = arith.mulf %172, %157 : vector<1x32xf32>
    %176 = arith.mulf %171, %173 : vector<1x32xf32>
    %177 = arith.addf %175, %176 : vector<1x32xf32>
    %178 = math.tanh %177 : vector<1x32xf32>
    %179 = arith.mulf %174, %178 : vector<1x32xf32>
    %c0_34 = arith.constant 0 : index
    %c0_35 = arith.constant 0 : index
    %180 = vector.load %arg4[%c0_34, %c0_35] : memref<1x32xf32, #tpu.memory_space<vmem>>, vector<1x32xf32>
    %181 = arith.mulf %179, %180 : vector<1x32xf32>
    %cst_36 = arith.constant dense<0.000000e+00> : vector<1xf32>
    %182 = vector.multi_reduction <add>, %181, %cst_36 [1] : vector<1x32xf32> to vector<1xf32>
    %183 = vector.shape_cast %182 : vector<1xf32> to vector<1x1xf32>
    %c0_37 = arith.constant 0 : index
    %c0_38 = arith.constant 0 : index
    %184 = vector.load %arg5[%c0_37, %c0_38] : memref<1x1xf32, #tpu.memory_space<vmem>>, vector<1x1xf32>
    %185 = arith.addf %183, %184 : vector<1x1xf32>
    %c0_39 = arith.constant 0 : index
    %c0_40 = arith.constant 0 : index
    %186 = vector.load %arg6[%c0_39, %c0_40] : memref<1x1xf32, #tpu.memory_space<vmem>>, vector<1x1xf32>
    tpu.vector_store %arg6[%c0_39, %c0_40], %185 {strides = array<i32>} : memref<1x1xf32, #tpu.memory_space<vmem>>, vector<1x1xf32>,
    return
  }
}

</mosaic_0001>

<llo_original>
// kernel: tpu_custom_call.1
$region0: #{tpu_custom_call.1}
  #allocation0 [shape = 'u32[]', space=smem, size = 0x4, offset = 0x4, fixed_abs, tag = 'smem constant byte address 0x4 - core index']
  #allocation1 [shape = 'u32[72,128]{1,0:T(1,128)}', space=vmem, size = 0x9000, scoped, tag = 'internal scratch']
  #allocation2 [shape = 'f32[1,1]{1,0:T(1,128)S(1)}', space=vmem, size = 0x200, scoped, tag = 'scoped memory for tpu_custom_call.1']
  %s0 = inlined_call_operand.vmem [shape: f32[8,1], index: 0, kind: input, shape index: {}]
  %s1 = inlined_call_operand.vmem [shape: f32[1,128], index: 1, kind: input, shape index: {}]
  %s2 = inlined_call_operand.hbm [shape: bf16[32,128], index: 2, kind: input, shape index: {}]
  %s3 = inlined_call_operand.vmem [shape: f32[1,128], index: 3, kind: input, shape index: {}]
  %s4 = inlined_call_operand.vmem [shape: f32[1,32], index: 4, kind: input, shape index: {}]
  %s5 = inlined_call_operand.<no memory space> [shape: f32[1,1], index: 5, kind: input, shape index: {}]
  %s6 = inlined_call_operand.hbm [shape: f32[1,1], index: 6, kind: output, shape index: {}]
  %s7 = sld [smem:[#allocation0]]
  $region38: #{tpu_custom_call.1} parent=0
    _
  %s9 = ssub.s32 1, %s7
  %s10 = scalar_select 0, %s9, %s7
  %v11 = vstv %s5
  %12 = vst [vmem:[#allocation2] sm:$0x1] %v11
  $region1: #{tpu_custom_call.1} parent=0
    #allocation3 [shape = 'u8[8192]{0}', space=vmem, size = 0x2000, scoped, tag = 'input window, operand 2, single buffered']
    #allocation4 [shape = 's32[1]{0}', space=sflag, size = 0x4, scoped, tag = 'scoped memory for tpu_custom_call.1']
    #allocation5 [shape = 's32[1]{0}', space=sflag, size = 0x4, scoped, tag = 'scoped memory for tpu_custom_call.1']
    #allocation6 [shape = 'u8[512]{0}', space=vmem, size = 0x400, scoped, tag = 'output window, operand 0, single buffered']
    %13 = vsyncpa [#allocation4], 0
    %14 = vsyncpa [#allocation5], 0
    // Predicated region
    $region2: #{tpu_custom_call.1} parent=1 // pred_check
      _
    $region3: #{tpu_custom_call.1} parent=1 // pred_check_branch
      %16 = sbr.rel (0) target = $region5
    $region4: #{tpu_custom_call.1} parent=1 // pred_region
      _
    $region5: #{tpu_custom_call.1} parent=1 // pred_fallthru
      _
    // Predicated region
    $region6: #{tpu_custom_call.1} parent=1 // pred_check
      _
    $region7: #{tpu_custom_call.1} parent=1 // pred_check_branch
      %18 = sbr.rel (0) target = $region9
    $region8: #{tpu_custom_call.1} parent=1 // pred_region
      _
    $region9: #{tpu_custom_call.1} parent=1 // pred_fallthru
      _
    // Predicated region
    $region10: #{tpu_custom_call.1} parent=1 // pred_check
      _
    $region11: #{tpu_custom_call.1} parent=1 // pred_check_branch
      %20 = sbr.rel (0) target = $region13
    $region12: #{tpu_custom_call.1} parent=1 // pred_region
      %22 = vsyncadd [#allocation4], 0
      %s23 = sshll.u32 %s2, 4
      %s24 = int_to_ptr.hbm [resolvable:$true] %s23
      %s25 = sshll.u32 [#allocation3], 4
      %s26 = int_to_ptr.vmem [resolvable:$true] %s25
      %31 = dma.hbm_to_vmem [thread:$0]  %s24, 256, %s26, [#allocation4], 64, 64, 4
    $region13: #{tpu_custom_call.1} parent=1 // pred_fallthru
      _
    // Predicated region
    $region14: #{tpu_custom_call.1} parent=1 // pred_check
      _
    $region15: #{tpu_custom_call.1} parent=1 // pred_check_branch
      %33 = sbr.rel (0) target = $region17
    $region16: #{tpu_custom_call.1} parent=1 // pred_region
      _
    $region17: #{tpu_custom_call.1} parent=1 // pred_fallthru
      _
    // Predicated region
    $region18: #{tpu_custom_call.1} parent=1 // pred_check
      _
    $region19: #{tpu_custom_call.1} parent=1 // pred_check_branch
      %35 = sbr.rel (0) target = $region21
    $region20: #{tpu_custom_call.1} parent=1 // pred_region
      _
    $region21: #{tpu_custom_call.1} parent=1 // pred_fallthru
      _
    // Predicated region
    $region22: #{tpu_custom_call.1} parent=1 // pred_check
      _
    $region23: #{tpu_custom_call.1} parent=1 // pred_check_branch
      %37 = sbr.rel (0) target = $region25
    $region24: #{tpu_custom_call.1} parent=1 // pred_region
      _
    $region25: #{tpu_custom_call.1} parent=1 // pred_fallthru
      _
    // Predicated region
    $region26: #{tpu_custom_call.1} parent=1 // pred_check
      _
    $region27: #{tpu_custom_call.1} parent=1 // pred_check_branch
      %39 = sbr.rel (0) target = $region29
    $region28: #{tpu_custom_call.1} parent=1 // pred_region
      %41 = dma.done [#allocation4], 256
    $region29: #{tpu_custom_call.1} parent=1 // pred_fallthru
      _
    %v43 = vld [vmem:[%s0] sm:$0xff]
    %v44 = vld [vmem:[%s1] sm:$0x1]
    %46 = vset.pattern.permute.xlu0 0
    %47 = vperm.xlu0 %46, %v43
    %v48 = vpop.permute.xlu0 %47
    %v51 = vperm.slane %v44, 0
    %v53 = vmul.f32 %v48, %v51
    %v54 = vld [vmem:[%s3] sm:$0x1]
    %v56 = vperm.slane %v54, 0
    %v58 = vadd.f32 %v53, %v56
    %v59 = vld [vmem:[#allocation3] sm:$0xf]
    %v60 = vld [vmem:[#allocation3 + $0x4] sm:$0xf]
    %v61 = vld [vmem:[#allocation3 + $0x8] sm:$0xf]
    %v62 = vld [vmem:[#allocation3 + $0xc] sm:$0xf]
    %v63 = vlaneseq
    %v64 = vand.u32 %v63, 127
    %vm65 = vcmp.ge.s32.totalorder %v64, 64
    %vm66 = vcmp.lt.s32.totalorder %v64, 96
    %vm67 = vmand %vm65, %vm66
    %v68 = vsel %vm67, 1.0, 0.5
    %v73 = vunpack.c.l.b16 %v59
    %v74 = vunpack.c.l.b16 %v60
    %v75 = vunpack.c.l.b16 %v61
    %v76 = vunpack.c.l.b16 %v62
    %v77 = vpack.c.b16 %v74, %v73
    %v78 = vpack.c.b16 %v76, %v75
    %vm81 = vcmask 261120
    %v83 = vsel %vm81, 0, 0
    %85 = vmatpush.bf16.msra.mxu0 0
    %86 = vmatpush.bf16.msra.mxu0 0
    %87 = vmatpush.bf16.msra.mxu0 0
    %88 = vmatpush.bf16.msra.mxu0 0
    %89 = vmatpush.bf16.msra.mxu0 0
    %90 = vmatpush.bf16.msra.mxu0 0
    %91 = vmatpush.bf16.msra.mxu0 %v78
    %92 = vmatpush.bf16.msra.mxu0 %v77
    %93 = vmatmul.bf16.gmra.mxu0 %v83
    %v94 = vpop.f32.mrf.mxu0
    %v95 = vadd.f32 0.0, %v94
    %v96 = vpop.f32.mrf.mxu0
    %97 = vdwg.mxu0
    %v98 = vadd.f32 %v58, %v95
    %v99 = vmul.f32 %v98, %v68
    %v100 = vtanh.pop %v99
    %v101 = vmul.f32 %v100, 0.5
    %v102 = vadd.f32 %v101, 0.5
    %v103 = vsel %vm67, %v100, %v102
    %v104 = vmul.f32 %v103, 0.0
    %106 = vrot.lane.b32.xlu0 %v103, 64
    %v107 = vpop.permute.xlu0 %106
    %v109 = vmul.f32 %v103, %v107
    %111 = vrot.lane.b32.xlu0 %v109, 32
    %v112 = vpop.permute.xlu0 %111
    %v114 = vadd.f32 %v104, %v112
    %v115 = vtanh.pop %v114
    %117 = vrot.lane.b32.xlu0 %v115, 64
    %v118 = vpop.permute.xlu0 %117
    %v120 = vmul.f32 %v103, %v118
    %v121 = vpack.c.bf16 %v120, %v120
    %123 = vrot.lane.b32.xlu0 %v121, 32
    %v124 = vpop.permute.xlu0 %123
    %v126 = vsel %vm81, %v124, 0
    %128 = vmatpush.bf16.msra.mxu0 0
    %129 = vmatpush.bf16.msra.mxu0 0
    %130 = vmatpush.bf16.msra.mxu0 0
    %131 = vmatpush.bf16.msra.mxu0 0
    %132 = vmatpush.bf16.msra.mxu0 0
    %133 = vmatpush.bf16.msra.mxu0 0
    %134 = vmatpush.bf16.msra.mxu0 %v78
    %135 = vmatpush.bf16.msra.mxu0 %v77
    %136 = vmatmul.bf16.gmra.mxu0 %v126
    %v137 = vpop.f32.mrf.mxu0
    %v138 = vadd.f32 0.0, %v137
    %v139 = vpop.f32.mrf.mxu0
    %140 = vdwg.mxu0
    %v142 = vrot.slane %v138, 7
    %v144 = vadd.f32 %v58, %v142
    %v145 = vmul.f32 %v144, %v68
    %v146 = vtanh.pop %v145
    %v147 = vmul.f32 %v146, 0.5
    %v148 = vadd.f32 %v147, 0.5
    %v149 = vsel %vm67, %v146, %v148
    %v151 = vrot.slane %v114, 7
    %v153 = vmul.f32 %v149, %v151
    %155 = vrot.lane.b32.xlu0 %v149, 64
    %v156 = vpop.permute.xlu0 %155
    %v158 = vmul.f32 %v149, %v156
    %160 = vrot.lane.b32.xlu0 %v158, 32
    %v161 = vpop.permute.xlu0 %160
    %v163 = vadd.f32 %v153, %v161
    %v164 = vtanh.pop %v163
    %166 = vrot.lane.b32.xlu0 %v164, 64
    %v167 = vpop.permute.xlu0 %166
    %v169 = vmul.f32 %v149, %v167
    %v170 = vpack.c.bf16 %v169, %v169
    %v172 = vshrl.u32 %v170, 16
    %174 = vrot.lane.b32.xlu0 %v172, 32
    %v175 = vpop.permute.xlu0 %174
    %v177 = vsel %vm81, %v175, 0
    %179 = vmatpush.bf16.msra.mxu0 0
    %180 = vmatpush.bf16.msra.mxu0 0
    %181 = vmatpush.bf16.msra.mxu0 0
    %182 = vmatpush.bf16.msra.mxu0 0
    %183 = vmatpush.bf16.msra.mxu0 0
    %184 = vmatpush.bf16.msra.mxu0 0
    %185 = vmatpush.bf16.msra.mxu0 %v78
    %186 = vmatpush.bf16.msra.mxu0 %v77
    %187 = vmatmul.bf16.gmra.mxu0 %v177
    %v188 = vpop.f32.mrf.mxu0
    %v189 = vadd.f32 0.0, %v188
    %v190 = vpop.f32.mrf.mxu0
    %191 = vdwg.mxu0
    %v193 = vrot.slane %v189, 6
    %v195 = vadd.f32 %v58, %v193
    %v196 = vmul.f32 %v195, %v68
    %v197 = vtanh.pop %v196
    %v198 = vmul.f32 %v197, 0.5
    %v199 = vadd.f32 %v198, 0.5
    %v200 = vsel %vm67, %v197, %v199
    %v202 = vrot.slane %v163, 7
    %v204 = vmul.f32 %v200, %v202
    %206 = vrot.lane.b32.xlu0 %v200, 64
    %v207 = vpop.permute.xlu0 %206
    %v209 = vmul.f32 %v200, %v207
    %211 = vrot.lane.b32.xlu0 %v209, 32
    %v212 = vpop.permute.xlu0 %211
    %v214 = vadd.f32 %v204, %v212
    %v215 = vtanh.pop %v214
    %217 = vrot.lane.b32.xlu0 %v215, 64
    %v218 = vpop.permute.xlu0 %217
    %v220 = vmul.f32 %v200, %v218
    %v221 = vpack.c.bf16 %v220, %v220
    %v223 = vrot.slane %v221, 1
    %224 = vrot.lane.b32.xlu0 %v223, 32
    %v225 = vpop.permute.xlu0 %224
    %v227 = vsel %vm81, %v225, 0
    %229 = vmatpush.bf16.msra.mxu0 0
    %230 = vmatpush.bf16.msra.mxu0 0
    %231 = vmatpush.bf16.msra.mxu0 0
    %232 = vmatpush.bf16.msra.mxu0 0
    %233 = vmatpush.bf16.msra.mxu0 0
    %234 = vmatpush.bf16.msra.mxu0 0
    %235 = vmatpush.bf16.msra.mxu0 %v78
    %236 = vmatpush.bf16.msra.mxu0 %v77
    %237 = vmatmul.bf16.gmra.mxu0 %v227
    %v238 = vpop.f32.mrf.mxu0
    %v239 = vadd.f32 0.0, %v238
    %v240 = vpop.f32.mrf.mxu0
    %241 = vdwg.mxu0
    %v243 = vrot.slane %v239, 5
    %v245 = vadd.f32 %v58, %v243
    %v246 = vmul.f32 %v245, %v68
    %v247 = vtanh.pop %v246
    %v248 = vmul.f32 %v247, 0.5
    %v249 = vadd.f32 %v248, 0.5
    %v250 = vsel %vm67, %v247, %v249
    %v252 = vrot.slane %v214, 7
    %v254 = vmul.f32 %v250, %v252
    %256 = vrot.lane.b32.xlu0 %v250, 64
    %v257 = vpop.permute.xlu0 %256
    %v259 = vmul.f32 %v250, %v257
    %261 = vrot.lane.b32.xlu0 %v259, 32
    %v262 = vpop.permute.xlu0 %261
    %v264 = vadd.f32 %v254, %v262
    %v265 = vtanh.pop %v264
    %267 = vrot.lane.b32.xlu0 %v265, 64
    %v268 = vpop.permute.xlu0 %267
    %v270 = vmul.f32 %v250, %v268
    %v271 = vpack.c.bf16 %v270, %v270
    %v273 = vshrl.u32 %v271, 16
    %v275 = vrot.slane %v273, 1
    %276 = vrot.lane.b32.xlu0 %v275, 32
    %v277 = vpop.permute.xlu0 %276
    %v279 = vsel %vm81, %v277, 0
    %281 = vmatpush.bf16.msra.mxu0 0
    %282 = vmatpush.bf16.msra.mxu0 0
    %283 = vmatpush.bf16.msra.mxu0 0
    %284 = vmatpush.bf16.msra.mxu0 0
    %285 = vmatpush.bf16.msra.mxu0 0
    %286 = vmatpush.bf16.msra.mxu0 0
    %287 = vmatpush.bf16.msra.mxu0 %v78
    %288 = vmatpush.bf16.msra.mxu0 %v77
    %289 = vmatmul.bf16.gmra.mxu0 %v279
    %v290 = vpop.f32.mrf.mxu0
    %v291 = vadd.f32 0.0, %v290
    %v292 = vpop.f32.mrf.mxu0
    %293 = vdwg.mxu0
    %v295 = vrot.slane %v291, 4
    %v297 = vadd.f32 %v58, %v295
    %v298 = vmul.f32 %v297, %v68
    %v299 = vtanh.pop %v298
    %v300 = vmul.f32 %v299, 0.5
    %v301 = vadd.f32 %v300, 0.5
    %v302 = vsel %vm67, %v299, %v301
    %v304 = vrot.slane %v264, 7
    %v306 = vmul.f32 %v302, %v304
    %308 = vrot.lane.b32.xlu0 %v302, 64
    %v309 = vpop.permute.xlu0 %308
    %v311 = vmul.f32 %v302, %v309
    %313 = vrot.lane.b32.xlu0 %v311, 32
    %v314 = vpop.permute.xlu0 %313
    %v316 = vadd.f32 %v306, %v314
    %v317 = vtanh.pop %v316
    %319 = vrot.lane.b32.xlu0 %v317, 64
    %v320 = vpop.permute.xlu0 %319
    %v322 = vmul.f32 %v302, %v320
    %v323 = vpack.c.bf16 %v322, %v322
    %v325 = vrot.slane %v323, 2
    %326 = vrot.lane.b32.xlu0 %v325, 32
    %v327 = vpop.permute.xlu0 %326
    %v329 = vsel %vm81, %v327, 0
    %331 = vmatpush.bf16.msra.mxu0 0
    %332 = vmatpush.bf16.msra.mxu0 0
    %333 = vmatpush.bf16.msra.mxu0 0
    %334 = vmatpush.bf16.msra.mxu0 0
    %335 = vmatpush.bf16.msra.mxu0 0
    %336 = vmatpush.bf16.msra.mxu0 0
    %337 = vmatpush.bf16.msra.mxu0 %v78
    %338 = vmatpush.bf16.msra.mxu0 %v77
    %339 = vmatmul.bf16.gmra.mxu0 %v329
    %v340 = vpop.f32.mrf.mxu0
    %v341 = vadd.f32 0.0, %v340
    %v342 = vpop.f32.mrf.mxu0
    %343 = vdwg.mxu0
    %v345 = vrot.slane %v341, 3
    %v347 = vadd.f32 %v58, %v345
    %v348 = vmul.f32 %v347, %v68
    %v349 = vtanh.pop %v348
    %v350 = vmul.f32 %v349, 0.5
    %v351 = vadd.f32 %v350, 0.5
    %v352 = vsel %vm67, %v349, %v351
    %v354 = vrot.slane %v316, 7
    %v356 = vmul.f32 %v352, %v354
    %358 = vrot.lane.b32.xlu0 %v352, 64
    %v359 = vpop.permute.xlu0 %358
    %v361 = vmul.f32 %v352, %v359
    %363 = vrot.lane.b32.xlu0 %v361, 32
    %v364 = vpop.permute.xlu0 %363
    %v366 = vadd.f32 %v356, %v364
    %v367 = vtanh.pop %v366
    %369 = vrot.lane.b32.xlu0 %v367, 64
    %v370 = vpop.permute.xlu0 %369
    %v372 = vmul.f32 %v352, %v370
    %v373 = vpack.c.bf16 %v372, %v372
    %v375 = vshrl.u32 %v373, 16
    %v377 = vrot.slane %v375, 2
    %378 = vrot.lane.b32.xlu0 %v377, 32
    %v379 = vpop.permute.xlu0 %378
    %v381 = vsel %vm81, %v379, 0
    %383 = vmatpush.bf16.msra.mxu0 0
    %384 = vmatpush.bf16.msra.mxu0 0
    %385 = vmatpush.bf16.msra.mxu0 0
    %386 = vmatpush.bf16.msra.mxu0 0
    %387 = vmatpush.bf16.msra.mxu0 0
    %388 = vmatpush.bf16.msra.mxu0 0
    %389 = vmatpush.bf16.msra.mxu0 %v78
    %390 = vmatpush.bf16.msra.mxu0 %v77
    %391 = vmatmul.bf16.gmra.mxu0 %v381
    %v392 = vpop.f32.mrf.mxu0
    %v393 = vadd.f32 0.0, %v392
    %v394 = vpop.f32.mrf.mxu0
    %395 = vdwg.mxu0
    %v397 = vrot.slane %v393, 2
    %v399 = vadd.f32 %v58, %v397
    %v400 = vmul.f32 %v399, %v68
    %v401 = vtanh.pop %v400
    %v402 = vmul.f32 %v401, 0.5
    %v403 = vadd.f32 %v402, 0.5
    %v404 = vsel %vm67, %v401, %v403
    %v406 = vrot.slane %v366, 7
    %v408 = vmul.f32 %v404, %v406
    %410 = vrot.lane.b32.xlu0 %v404, 64
    %v411 = vpop.permute.xlu0 %410
    %v413 = vmul.f32 %v404, %v411
    %415 = vrot.lane.b32.xlu0 %v413, 32
    %v416 = vpop.permute.xlu0 %415
    %v418 = vadd.f32 %v408, %v416
    %v419 = vtanh.pop %v418
    %421 = vrot.lane.b32.xlu0 %v419, 64
    %v422 = vpop.permute.xlu0 %421
    %v424 = vmul.f32 %v404, %v422
    %v425 = vpack.c.bf16 %v424, %v424
    %v427 = vrot.slane %v425, 3
    %428 = vrot.lane.b32.xlu0 %v427, 32
    %v429 = vpop.permute.xlu0 %428
    %v431 = vsel %vm81, %v429, 0
    %433 = vmatpush.bf16.msra.mxu0 0
    %434 = vmatpush.bf16.msra.mxu0 0
    %435 = vmatpush.bf16.msra.mxu0 0
    %436 = vmatpush.bf16.msra.mxu0 0
    %437 = vmatpush.bf16.msra.mxu0 0
    %438 = vmatpush.bf16.msra.mxu0 0
    %439 = vmatpush.bf16.msra.mxu0 %v78
    %440 = vmatpush.bf16.msra.mxu0 %v77
    %441 = vmatmul.bf16.gmra.mxu0 %v431
    %v442 = vpop.f32.mrf.mxu0
    %v443 = vadd.f32 0.0, %v442
    %v444 = vpop.f32.mrf.mxu0
    %445 = vdwg.mxu0
    %v447 = vrot.slane %v443, 1
    %v449 = vadd.f32 %v58, %v447
    %v450 = vmul.f32 %v449, %v68
    %v451 = vtanh.pop %v450
    %v452 = vmul.f32 %v451, 0.5
    %v453 = vadd.f32 %v452, 0.5
    %v454 = vsel %vm67, %v451, %v453
    %v456 = vrot.slane %v418, 7
    %v458 = vmul.f32 %v454, %v456
    %460 = vrot.lane.b32.xlu0 %v454, 64
    %v461 = vpop.permute.xlu0 %460
    %v463 = vmul.f32 %v454, %v461
    %465 = vrot.lane.b32.xlu0 %v463, 32
    %v466 = vpop.permute.xlu0 %465
    %v468 = vadd.f32 %v458, %v466
    %v469 = vtanh.pop %v468
    %471 = vrot.lane.b32.xlu0 %v469, 64
    %v472 = vpop.permute.xlu0 %471
    %v474 = vmul.f32 %v454, %v472
    %v475 = vld [vmem:[%s4] sm:$0x1]
    %v477 = vperm.slane %v475, 0
    %478 = vrot.lane.b32.xlu0 %v477, 96
    %v479 = vpop.permute.xlu0 %478
    %v481 = vmul.f32 %v474, %v479
    %483 = vrot.lane.b32.xlu0 %v481, 32
    %v484 = vpop.permute.xlu0 %483
    %vm486 = vcmask 261127
    %v487 = vsel %vm486, %v484, 0.0
    %488 = vadd.xlane.f32.xlu0 %v487
    %v489 = vpop.xlane.xlu0 %488
    %v490 = vld [vmem:[#allocation2] sm:$0x1]
    %v492 = vperm.slane %v490, 0
    %v494 = vadd.f32 %v489, %v492
    %vm495 = vcmask 7175
    %496 = vst.msk [vmem:[#allocation6 - $0x7] sm:$0x80] %vm495, %v494
    // Predicated region
    $region30: #{tpu_custom_call.1} parent=1 // pred_check
      _
    $region31: #{tpu_custom_call.1} parent=1 // pred_check_branch
      %498 = sbr.rel (0) target = $region33
    $region32: #{tpu_custom_call.1} parent=1 // pred_region
      %500 = vsyncadd [#allocation5], 0
      %s502 = sshll.u32 [#allocation6], 4
      %s503 = int_to_ptr.vmem [resolvable:$true] %s502
      %s504 = sshll.u32 %s6, 4
      %s505 = int_to_ptr.hbm [resolvable:$true] %s504
      %507 = dma.vmem_to_hbm [thread:$0]  %s503, 16, %s505, [#allocation5]
    $region33: #{tpu_custom_call.1} parent=1 // pred_fallthru
      _
    // Predicated region
    $region34: #{tpu_custom_call.1} parent=1 // pred_check
      _
    $region35: #{tpu_custom_call.1} parent=1 // pred_check_branch
      %509 = sbr.rel (0) target = $region37
    $region36: #{tpu_custom_call.1} parent=1 // pred_region
      %511 = dma.done [#allocation5], 16
    $region37: #{tpu_custom_call.1} parent=1 // pred_fallthru
      _
    %512 = vsyncpa [#allocation4], 1
    %513 = vsyncpa [#allocation5], 1

</llo_original>
